<compile_context>
chip_gen: v7x
topology: tpu7x:2x2x1
jax: 0.10.0
libtpu: 0.0.40
codegen_flags: <defaults>
</compile_context>

<pallas_src>
import math

import jax
import jax.numpy as jnp
from jax.experimental import pallas as pl
from jax.experimental.pallas import tpu as pltpu


_LANES = 128


def _build_pe(d_model: int, max_len: int, dtype=jnp.float32) -> jnp.ndarray:
    """Sin/cos positional-encoding table, shape (1, max_len, d_model), in `dtype`."""
    position = jnp.arange(max_len, dtype=jnp.float32)[:, None]              # (L, 1)
    div_term = jnp.exp(
        jnp.arange(0, d_model, 2, dtype=jnp.float32) * -(math.log(10000.0) / d_model)
    )                                                                        # (ceil(D/2),)
    angles = position * div_term                                             # (L, ceil(D/2))
    pe = jnp.zeros((max_len, d_model), dtype=jnp.float32)
    pe = pe.at[:, 0::2].set(jnp.sin(angles))
    n_odd = pe[:, 1::2].shape[1]
    pe = pe.at[:, 1::2].set(jnp.cos(angles)[:, :n_odd])
    return pe[None, :, :].astype(dtype)                                      # (1, L, D)


def _pe_add_kernel(x_ref, pe_ref, o_ref):
    # x_ref: (bb, r, 128), pe_ref: (1, r, 128) -> batch-broadcast add on the VPU.
    o_ref[...] = (x_ref[...] + pe_ref[...]).astype(o_ref.dtype)


def positional_encoding_forward(
    x: jnp.ndarray,
    pe: jnp.ndarray,
    *,
    vmem_budget_bytes: int = 4 * 1024 * 1024,
    min_pallas_bytes: int = 256 * 1024,
    donate_x: bool = True,
) -> jnp.ndarray:
    """Returns x + pe[:, :S, :] for x of shape (B, S, D).

    `pe` is the PE table, shape (1, max_len, D) or pre-flattened (1, max_len*D),
    built in the model dtype (see _build_pe).

    NOTE: with donate_x=True the Pallas path writes in place (the output aliases
    the kernel input buffer); do not rely on reusing that buffer afterwards.
    """
    B, S, D = x.shape
    N = S * D
    itemsize = jnp.dtype(x.dtype).itemsize

    pe_flat = pe.reshape(1, -1)
    if pe_flat.dtype != x.dtype:
        # TODO(synk): build the PE table in the model dtype to avoid this per-call cast.
        pe_flat = pe_flat.astype(x.dtype)
    pe_cols = pe_flat.shape[1]
    assert pe_cols >= N, "sequence longer than the positional-encoding table"

    # Tiny activations: fixed pallas_call/grid overhead dominates; XLA's fused
    # broadcast add is strictly faster on all generations.
    if B * N * itemsize < min_pallas_bytes:
        return x + pe_flat[:, :N].reshape(1, S, D)

    if N % _LANES != 0 or pe_cols % _LANES != 0:
        # TODO(synk): S*D not lane-aligned; keep the XLA fused add rather than pad/copy.
        return x + pe_flat[:, :N].reshape(1, S, D)

    sub = max(8, 32 // itemsize)           # sublane pack: 8 (f32) / 16 (bf16) / 32 (i8)
    Nr = N // _LANES                       # 128-lane rows in x
    Lr = pe_cols // _LANES                 # 128-lane rows in the full PE table

    # Batch tile: shrink only if a single sublane-group block would blow the budget.
    bb = B
    while bb > 1 and (4 * bb + 2) * sub * _LANES * itemsize > vmem_budget_bytes:
        bb = (bb + 1) // 2
    n_batch_tiles = pl.cdiv(B, bb)

    if Nr < sub:
        # Row extent smaller than one sublane group (normally served by the bypass):
        # one full-extent block; slice PE so every block dim equals its array dim.
        r = Nr
        pe_in = (pe_flat if Lr == Nr else pe_flat[:, :N]).reshape(1, Nr, _LANES)
    else:
        # Rows per block: multiple of the sublane pack, sized so double-buffered
        # x + out (bb rows each) plus double-buffered pe (1 row) fit the budget.
        row_group_bytes = (4 * bb + 2) * sub * _LANES * itemsize
        r = max(1, vmem_budget_bytes // row_group_bytes) * sub
        r = min(r, (Nr // sub) * sub)
        # v7x megacore: keep >= 2 grid tiles when there is enough work to split.
        if n_batch_tiles == 1 and Nr >= 2 * sub:
            r = min(r, pl.cdiv(pl.cdiv(Nr, 2), sub) * sub)
        pe_in = pe_flat.reshape(1, Lr, _LANES)   # full table; grid reads rows < Nr only
    n_row_tiles = pl.cdiv(Nr, r)

    x3 = x.reshape(B, Nr, _LANES)

    # Explicit scoped-VMEM limit (portable across the 16/32 MiB generation defaults);
    # `footprint` already accounts for double-buffering and sublane padding.
    footprint = (4 * bb + 2) * max(r, sub) * _LANES * itemsize
    vmem_limit = int(min(max(2 * footprint, 4 << 20), 32 << 20))

    out3 = pl.pallas_call(
        _pe_add_kernel,
        out_shape=jax.ShapeDtypeStruct((B, Nr, _LANES), x.dtype),
        grid_spec=pltpu.PrefetchScalarGridSpec(
            num_scalar_prefetch=0,
            grid=(n_batch_tiles, n_row_tiles),
            in_specs=[
                pl.BlockSpec((bb, r, _LANES), lambda b, t: (b, t, 0)),   # x
                pl.BlockSpec((1, r, _LANES), lambda b, t: (0, t, 0)),    # pe (batch bcast)
            ],
            out_specs=pl.BlockSpec((bb, r, _LANES), lambda b, t: (b, t, 0)),
        ),
        compiler_params=pltpu.CompilerParams(
            dimension_semantics=("parallel", "parallel"),
            vmem_limit_bytes=vmem_limit,
        ),
        cost_estimate=pl.CostEstimate(
            flops=B * N,
            bytes_accessed=(2 * B + 1) * N * itemsize,
            transcendentals=0,
        ),
        input_output_aliases=({0: 0} if donate_x else {}),   # in-place add
    )(x3, pe_in)
    return out3.reshape(B, S, D)


if __name__ == "__main__":
    SEQUENCE_LENGTH = 16   # max_len of the PE buffer
    D_MODEL = 32
    BATCH = 2
    SEQ = 8                # x.shape[1] <= max_len

    dtype = jnp.float32
    pe_table = _build_pe(D_MODEL, SEQUENCE_LENGTH, dtype)             # (1, L, D)
    pe_flat = pe_table.reshape(1, SEQUENCE_LENGTH * D_MODEL)          # built once, model dtype

    key = jax.random.PRNGKey(0)
    x = jax.random.normal(key, (BATCH, SEQ, D_MODEL), dtype=dtype)

    # Reference and the XLA bypass path are evaluated BEFORE the donating kernel call.
    ref = x + pe_table[:, :SEQ, :]
    out_bypass = jax.block_until_ready(positional_encoding_forward(x, pe_flat))
    assert jnp.allclose(out_bypass, ref, atol=1e-6), "bypass mismatch vs reference"

    # Force the Pallas path (the demo activation is tiny, below the bypass threshold).
    out = positional_encoding_forward(x, pe_flat, min_pallas_bytes=0)
    out = jax.block_until_ready(out)

    assert out.shape == (BATCH, SEQ, D_MODEL)
    assert jnp.allclose(out, ref, atol=1e-6), "Pallas kernel mismatch vs reference"

    print("KERNEL_OK")
</pallas_src>

<mosaic_0001>
module attributes {stable_mosaic.version = 11 : i64} {
  func.func @_pe_add_kernel(%arg0: i32, %arg1: i32, %arg2: memref<2x2x128xf32, #tpu.memory_space<vmem>>, %arg3: memref<1x2x128xf32, #tpu.memory_space<vmem>>, %arg4: memref<2x2x128xf32, #tpu.memory_space<vmem>>) attributes {dimension_semantics = [#tpu.dimension_semantics<parallel>, #tpu.dimension_semantics<parallel>], iteration_bounds = array<i64: 1, 1>, scalar_prefetch = 0 : i64, scratch_operands = 0 : i64, tpu.core_type = #tpu.core_type<tc>, window_params = [{transform_indices = @transform_0, window_bounds = array<i64: 2, 2, 128>}, {transform_indices = @transform_1, window_bounds = array<i64: 1, 2, 128>}, {transform_indices = @transform_2, window_bounds = array<i64: 2, 2, 128>}]} {
    %c0 = arith.constant 0 : index
    %c0_0 = arith.constant 0 : index
    %c0_1 = arith.constant 0 : index
    %0 = vector.load %arg2[%c0, %c0_0, %c0_1] : memref<2x2x128xf32, #tpu.memory_space<vmem>>, vector<2x2x128xf32>
    %c0_2 = arith.constant 0 : index
    %c0_3 = arith.constant 0 : index
    %c0_4 = arith.constant 0 : index
    %1 = vector.load %arg3[%c0_2, %c0_3, %c0_4] : memref<1x2x128xf32, #tpu.memory_space<vmem>>, vector<1x2x128xf32>
    %2 = vector.broadcast %1 : vector<1x2x128xf32> to vector<2x2x128xf32>
    %3 = arith.addf %0, %2 : vector<2x2x128xf32>
    %c0_5 = arith.constant 0 : index
    %c0_6 = arith.constant 0 : index
    %c0_7 = arith.constant 0 : index
    %4 = vector.load %arg4[%c0_5, %c0_6, %c0_7] : memref<2x2x128xf32, #tpu.memory_space<vmem>>, vector<2x2x128xf32>
    tpu.vector_store %arg4[%c0_5, %c0_6, %c0_7], %3 {strides = array<i32>} : memref<2x2x128xf32, #tpu.memory_space<vmem>>, vector<2x2x128xf32>,
    return
  }
  func.func @transform_0(%arg0: i32, %arg1: i32) -> (i32, i32, i32) {
    %c0_i32 = arith.constant 0 : i32
    %c0_i32_0 = arith.constant 0 : i32
    return %arg0, %arg1, %c0_i32 : i32, i32, i32
  }
  func.func @transform_1(%arg0: i32, %arg1: i32) -> (i32, i32, i32) {
    %c0_i32 = arith.constant 0 : i32
    %c0_i32_0 = arith.constant 0 : i32
    %c0_i32_1 = arith.constant 0 : i32
    return %c0_i32, %arg1, %c0_i32_0 : i32, i32, i32
  }
  func.func @transform_2(%arg0: i32, %arg1: i32) -> (i32, i32, i32) {
    %c0_i32 = arith.constant 0 : i32
    %c0_i32_0 = arith.constant 0 : i32
    return %arg0, %arg1, %c0_i32 : i32, i32, i32
  }
}

</mosaic_0001>

<llo_original>
// kernel: tpu_custom_call.1
$region0: #{tpu_custom_call.1}
  #allocation0 [shape = 'u32[]', space=smem, size = 0x4, offset = 0x4, fixed_abs, tag = 'smem constant byte address 0x4 - core index']
  #allocation1 [shape = 'u32[144,128]{1,0:T(1,128)}', space=vmem, size = 0x12000, scoped, tag = 'internal scratch']
  %s0 = inlined_call_operand.hbm [shape: f32[2,2,128], index: 0, kind: input, shape index: {}, may-alias: {0,2}]
  %s1 = inlined_call_operand.vmem [shape: f32[1,2,128], index: 1, kind: input, shape index: {}]
  %s2 = inlined_call_operand.hbm [shape: f32[2,2,128], index: 2, kind: output, shape index: {}, may-alias: {0,2}]
  %s3 = sld [smem:[#allocation0]]
  $region22: #{tpu_custom_call.1} parent=0
    _
  %s5 = ssub.s32 1, %s3
  %s6 = scalar_select 0, %s5, %s3
  $region1: #{tpu_custom_call.1} parent=0
    #allocation2 [shape = 'u8[2048]{0}', space=vmem, size = 0x800, scoped, tag = 'input window, operand 0, single buffered']
    #allocation3 [shape = 's32[1]{0}', space=sflag, size = 0x4, scoped, tag = 'scoped memory for tpu_custom_call.1']
    #allocation4 [shape = 's32[1]{0}', space=sflag, size = 0x4, scoped, tag = 'scoped memory for tpu_custom_call.1']
    #allocation5 [shape = 'u8[2048]{0}', space=vmem, size = 0x800, scoped, tag = 'output window, operand 0, single buffered']
    %7 = vsyncpa [#allocation3], 0
    %8 = vsyncpa [#allocation4], 0
    // Predicated region
    $region2: #{tpu_custom_call.1} parent=1 // pred_check
      _
    $region3: #{tpu_custom_call.1} parent=1 // pred_check_branch
      %10 = sbr.rel (0) target = $region5
    $region4: #{tpu_custom_call.1} parent=1 // pred_region
      %s12 = ssub.s32 64, 64
      %13 = vsyncadd [#allocation3], %s12
      %s14 = sshll.u32 [#allocation2], 4
      %s15 = int_to_ptr.vmem [resolvable:$true] %s14
      %20 = dma.hbm_to_vmem [thread:$0]  %s0, 64, %s15, [#allocation3], 32, 32, 2
    $region5: #{tpu_custom_call.1} parent=1 // pred_fallthru
      _
    // Predicated region
    $region6: #{tpu_custom_call.1} parent=1 // pred_check
      _
    $region7: #{tpu_custom_call.1} parent=1 // pred_check_branch
      %22 = sbr.rel (0) target = $region9
    $region8: #{tpu_custom_call.1} parent=1 // pred_region
      _
    $region9: #{tpu_custom_call.1} parent=1 // pred_fallthru
      _
    // Predicated region
    $region10: #{tpu_custom_call.1} parent=1 // pred_check
      _
    $region11: #{tpu_custom_call.1} parent=1 // pred_check_branch
      %24 = sbr.rel (0) target = $region13
    $region12: #{tpu_custom_call.1} parent=1 // pred_region
      %25 = dma.done [#allocation3], 64
    $region13: #{tpu_custom_call.1} parent=1 // pred_fallthru
      _
    %v26 = vld [vmem:[#allocation2] sm:$0x3]
    %v27 = vld [vmem:[#allocation2 + $0x2] sm:$0x3]
    %v28 = vld [vmem:[%s1] sm:$0x3]
    %v29 = vadd.f32 %v26, %v28
    %v30 = vadd.f32 %v27, %v28
    %31 = vst [vmem:[#allocation5] sm:$0x3] %v29
    %32 = vst [vmem:[#allocation5 + $0x2] sm:$0x3] %v30
    // Predicated region
    $region14: #{tpu_custom_call.1} parent=1 // pred_check
      _
    $region15: #{tpu_custom_call.1} parent=1 // pred_check_branch
      %34 = sbr.rel (0) target = $region17
    $region16: #{tpu_custom_call.1} parent=1 // pred_region
      %s36 = ssub.s32 64, 64
      %37 = vsyncadd [#allocation4], %s36
      %s38 = sshll.u32 [#allocation5], 4
      %s39 = int_to_ptr.vmem [resolvable:$true] %s38
      %44 = dma.vmem_to_hbm [thread:$0]  %s39, 64, %s2, [#allocation4], 32, 32, 2
    $region17: #{tpu_custom_call.1} parent=1 // pred_fallthru
      _
    // Predicated region
    $region18: #{tpu_custom_call.1} parent=1 // pred_check
      _
    $region19: #{tpu_custom_call.1} parent=1 // pred_check_branch
      %46 = sbr.rel (0) target = $region21
    $region20: #{tpu_custom_call.1} parent=1 // pred_region
      %47 = dma.done [#allocation4], 64
    $region21: #{tpu_custom_call.1} parent=1 // pred_fallthru
      _
    %48 = vsyncpa [#allocation3], 1
    %49 = vsyncpa [#allocation4], 1

</llo_original>
